<compile_context>
chip_gen: v5e
topology: v5e:2x2
jax: 0.10.0
libtpu: 0.0.40
codegen_flags: <defaults>
</compile_context>

<pallas_src>
import math

import numpy as np
import jax
import jax.numpy as jnp
from jax.experimental import pallas as pl
from jax.experimental.pallas import tpu as pltpu


# --------------------------------------------------------------------------
# init-time PE table construction (matches the PyTorch __init__ / register_buffer)
# --------------------------------------------------------------------------
def make_positional_encoding(ft_size, time_len, domain, joint_num=22):
    if domain in ("temporal", "mask_t"):
        pos_list = np.arange(joint_num * time_len)
    elif domain in ("spatial", "mask_s"):
        pos_list = np.tile(np.arange(joint_num), time_len)
    else:
        raise ValueError(f"unknown domain: {domain}")

    position = pos_list.astype(np.float32)[:, None]                 # (L, 1)
    pe = np.zeros((time_len * joint_num, ft_size), dtype=np.float32)
    div_term = np.exp(
        np.arange(0, ft_size, 2, dtype=np.float32) * -(math.log(10000.0) / ft_size)
    )
    pe[:, 0::2] = np.sin(position * div_term)
    pe[:, 1::2] = np.cos(position * div_term)
    return jnp.asarray(pe)                                           # (L, ft_size)


# --------------------------------------------------------------------------
# forward kernel: out = x + pe   (broadcast over batch)
# --------------------------------------------------------------------------
def _pe_add_kernel(x_ref, pe_ref, o_ref):
    x = x_ref[...].astype(jnp.float32)        # (1, tile_s, F)
    pe = pe_ref[...].astype(jnp.float32)      # (tile_s, F)
    o_ref[...] = (x + pe[None, :, :]).astype(o_ref.dtype)


def _choose_tile_s(seq_len, ft_dim, dtype_bytes):
    # Target ~2 MiB per x block. With x/pe/out double-buffered this stays well
    # under the 32 MiB scoped VMEM default on every generation (incl. v7x 64 MiB
    # physical), while being large enough that per-grid-step overhead (~0.35 us)
    # is negligible for a memory-bound op.
    target_bytes = 2 * 1024 * 1024
    t = max(8, target_bytes // max(1, ft_dim * dtype_bytes))
    t = min(t, 1024)                 # keep several grid steps for megacore sharding
    t = (t // 32) * 32               # multiple of 32: safe sublane packing for f32/bf16
    if t >= seq_len:
        return seq_len               # block == full dim is always legal
    return max(32, t)


def positional_encoding_pallas(x, pe_full, tile_s=None):
    """x: (batch, seq, ft_dim); pe_full: (max_len, ft_dim) with max_len >= seq."""
    B, S, F = x.shape
    pe = pe_full[:S]                 # matches pe[:, :x.size(1)] (tiny relative to x)

    if tile_s is None:
        tile_s = _choose_tile_s(S, F, jnp.dtype(x.dtype).itemsize)

    grid = (B, pl.cdiv(S, tile_s))   # ragged last tile handled by Pallas (masked writes)

    # TODO(synk): for ft_dim < 128 (like the small test below) the lane axis is only
    # partially used; a lane-dense repack would help store throughput but changes layout.
    out = pl.pallas_call(
        _pe_add_kernel,
        out_shape=jax.ShapeDtypeStruct((B, S, F), x.dtype),
        grid_spec=pltpu.PrefetchScalarGridSpec(
            num_scalar_prefetch=0,
            grid=grid,
            in_specs=[
                pl.BlockSpec((1, tile_s, F), lambda b, i: (b, i, 0)),
                pl.BlockSpec((tile_s, F), lambda b, i: (i, 0)),
            ],
            out_specs=pl.BlockSpec((1, tile_s, F), lambda b, i: (b, i, 0)),
        ),
        compiler_params=pltpu.CompilerParams(
            dimension_semantics=("parallel", "parallel"),
        ),
    )(x, pe)
    return out


# --------------------------------------------------------------------------
# pure-JAX reference
# --------------------------------------------------------------------------
def positional_encoding_ref(x, pe_full):
    S = x.shape[1]
    return (x.astype(jnp.float32) + pe_full[None, :S, :]).astype(x.dtype)


if __name__ == "__main__":
    key = jax.random.PRNGKey(0)

    # Small shapes consistent with the module: joint_num=22, time_len=8, ft_size=32.
    ft_size, time_len, domain = 32, 8, "spatial"
    joint_num = 22
    batch = 2
    seq = time_len * joint_num                 # 176

    pe_buf = make_positional_encoding(ft_size, time_len, domain, joint_num)
    x = jax.random.normal(key, (batch, seq, ft_size), dtype=jnp.float32)

    out = positional_encoding_pallas(x, pe_buf)
    out = jax.block_until_ready(out)

    ref = positional_encoding_ref(x, pe_buf)
    assert out.shape == x.shape and out.dtype == x.dtype
    assert jnp.allclose(out, ref, atol=1e-6, rtol=1e-6), "mismatch vs reference"

    print("KERNEL_OK")
</pallas_src>

<mosaic_0001>
module attributes {stable_mosaic.version = 11 : i64} {
  func.func @_pe_add_kernel(%arg0: i32, %arg1: i32, %arg2: memref<1x176x32xf32, #tpu.memory_space<vmem>>, %arg3: memref<176x32xf32, #tpu.memory_space<vmem>>, %arg4: memref<1x176x32xf32, #tpu.memory_space<vmem>>) attributes {dimension_semantics = [#tpu.dimension_semantics<parallel>, #tpu.dimension_semantics<parallel>], iteration_bounds = array<i64: 2, 1>, scalar_prefetch = 0 : i64, scratch_operands = 0 : i64, tpu.core_type = #tpu.core_type<tc>, window_params = [{transform_indices = @transform_0, window_bounds = array<i64: 1, 176, 32>}, {transform_indices = @transform_1, window_bounds = array<i64: 176, 32>}, {transform_indices = @transform_2, window_bounds = array<i64: 1, 176, 32>}]} {
    %c0 = arith.constant 0 : index
    %c0_0 = arith.constant 0 : index
    %c0_1 = arith.constant 0 : index
    %0 = vector.load %arg2[%c0, %c0_0, %c0_1] : memref<1x176x32xf32, #tpu.memory_space<vmem>>, vector<1x176x32xf32>
    %c0_2 = arith.constant 0 : index
    %c0_3 = arith.constant 0 : index
    %1 = vector.load %arg3[%c0_2, %c0_3] : memref<176x32xf32, #tpu.memory_space<vmem>>, vector<176x32xf32>
    %2 = vector.shape_cast %1 : vector<176x32xf32> to vector<1x176x32xf32>
    %3 = arith.addf %0, %2 : vector<1x176x32xf32>
    %c0_4 = arith.constant 0 : index
    %c0_5 = arith.constant 0 : index
    %c0_6 = arith.constant 0 : index
    %4 = vector.load %arg4[%c0_4, %c0_5, %c0_6] : memref<1x176x32xf32, #tpu.memory_space<vmem>>, vector<1x176x32xf32>
    tpu.vector_store %arg4[%c0_4, %c0_5, %c0_6], %3 {strides = array<i32>} : memref<1x176x32xf32, #tpu.memory_space<vmem>>, vector<1x176x32xf32>,
    return
  }
  func.func @transform_0(%arg0: i32, %arg1: i32) -> (i32, i32, i32) {
    %c0_i32 = arith.constant 0 : i32
    %c0_i32_0 = arith.constant 0 : i32
    return %arg0, %arg1, %c0_i32 : i32, i32, i32
  }
  func.func @transform_1(%arg0: i32, %arg1: i32) -> (i32, i32) {
    %c0_i32 = arith.constant 0 : i32
    %c0_i32_0 = arith.constant 0 : i32
    return %arg1, %c0_i32 : i32, i32
  }
  func.func @transform_2(%arg0: i32, %arg1: i32) -> (i32, i32, i32) {
    %c0_i32 = arith.constant 0 : i32
    %c0_i32_0 = arith.constant 0 : i32
    return %arg0, %arg1, %c0_i32 : i32, i32, i32
  }
}

</mosaic_0001>

<llo_original>
// kernel: tpu_custom_call.1
$region0: #{tpu_custom_call.1}
  #allocation0 [shape = 'u32[]', space=smem, size = 0x4, offset = 0x4, fixed_abs, tag = 'smem constant byte address 0x4 - core index']
  #allocation1 [shape = 'u32[72,128]{1,0:T(1,128)}', space=vmem, size = 0x9000, scoped, tag = 'internal scratch']
  %s0 = inlined_call_operand.vmem [shape: f32[2,176,32], index: 0, kind: input, shape index: {}]
  %s1 = inlined_call_operand.vmem [shape: f32[176,32], index: 1, kind: input, shape index: {}]
  %s2 = inlined_call_operand.vmem [shape: f32[2,176,32], index: 2, kind: output, shape index: {}]
  %s3 = sld [smem:[#allocation0]]
  $region41: #{tpu_custom_call.1} parent=0
    _
  %s5 = ssub.s32 1, %s3
  %s6 = scalar_select 0, %s5, %s3
  loop: start=0, step=1, limit=4
  $region2: #{tpu_custom_call.1} parent=0 // loop_pre_header
    _
  $region3: #{tpu_custom_call.1} parent=0 // loop_header
    %s8 = sphi 0, %s12
    %p9 = scmp.ge.s32.totalorder %s8, 4
    %s15 = sphi 0, %s27
    %s16 = sphi 0, %s23
    %s17 = sphi 0, %s15
    %s18 = sphi 0, %s16
    %s19 = sphi 0, %s17
    %s20 = sphi 0, %s18
    %s32 = sphi 0, %s34
    %s35 = sphi 0, %s32
    %s36 = sphi 0, %s35
    %s52 = sphi 0, %s36
    %s58 = sphi 0, %s60
    %s61 = sphi 0, %s58
    %s62 = sphi 0, %s61
    %s78 = sphi 0, %s62
    %s86 = sphi 0, %s88
    %s89 = sphi 0, %s86
    %s90 = sphi 0, %s89
    %s106 = sphi 0, %s90
  $region4: #{tpu_custom_call.1} parent=0 // loop_header_branch
    %11 = sbr.rel (%p9) target = $region8
  $region5: #{tpu_custom_call.1} parent=0 // loop_body
    %s13 = ssub.s32 %s8, 1
    %s14 = ssub.s32 %s8, 2
    %s21 = sadd.s32 1, %s16
    %p22 = scmp.ge.s32.totalorder %s21, 1
    %s23 = scalar_select %p22, 0, %s21
    %s24 = sadd.s32 1, %s15
    %s25 = scalar_select %p22, %s24, %s15
    %p26 = scmp.ge.s32.totalorder %s25, 2
    %s27 = scalar_select %p26, 0, %s25
    %s28 = ssub.s32 %s15, %s27
    %s29 = ssub.s32 %s16, %s23
    %s30 = sor.u32 %s28, %s29
    %p31 = scmp.eq.s32.totalorder %s30, 0
    %s33 = sadd.s32 %s32, 1
    %s34 = scalar_select %p31, %s32, %s33
    %p37 = pneg %p31
    %p38 = scmp.eq.s32.totalorder %s8, 1
    %p39 = por %p37, %p38
    %p40 = scmp.ne.s32.totalorder %s32, %s35
    %p41 = scmp.eq.s32.totalorder %s8, 0
    %p42 = por %p40, %p41
    %p43 = scmp.ne.s32.totalorder %s32, %s35
    %p44 = scmp.eq.s32.totalorder %s13, 1
    %p45 = por %p43, %p44
    %p46 = scmp.ne.s32.totalorder %s35, %s36
    %p47 = scmp.eq.s32.totalorder %s13, 0
    %p48 = por %p46, %p47
    %p49 = scmp.ne.s32.totalorder %s35, %s36
    %p50 = scmp.eq.s32.totalorder %s14, 1
    %p51 = por %p49, %p50
    %p53 = scmp.ne.s32.totalorder %s36, %s52
    %p54 = scmp.eq.s32.totalorder %s14, 0
    %p55 = por %p53, %p54
    %s56 = ssub.s32 %s16, %s23
    %p57 = scmp.eq.s32.totalorder %s56, 0
    %s59 = sadd.s32 %s58, 1
    %s60 = scalar_select %p57, %s58, %s59
    %p63 = pneg %p57
    %p64 = scmp.eq.s32.totalorder %s8, 1
    %p65 = por %p63, %p64
    %p66 = scmp.ne.s32.totalorder %s58, %s61
    %p67 = scmp.eq.s32.totalorder %s8, 0
    %p68 = por %p66, %p67
    %p69 = scmp.ne.s32.totalorder %s58, %s61
    %p70 = scmp.eq.s32.totalorder %s13, 1
    %p71 = por %p69, %p70
    %p72 = scmp.ne.s32.totalorder %s61, %s62
    %p73 = scmp.eq.s32.totalorder %s13, 0
    %p74 = por %p72, %p73
    %p75 = scmp.ne.s32.totalorder %s61, %s62
    %p76 = scmp.eq.s32.totalorder %s14, 1
    %p77 = por %p75, %p76
    %p79 = scmp.ne.s32.totalorder %s62, %s78
    %p80 = scmp.eq.s32.totalorder %s14, 0
    %p81 = por %p79, %p80
    %s82 = ssub.s32 %s15, %s27
    %s83 = ssub.s32 %s16, %s23
    %s84 = sor.u32 %s82, %s83
    %p85 = scmp.eq.s32.totalorder %s84, 0
    %s87 = sadd.s32 %s86, 1
    %s88 = scalar_select %p85, %s86, %s87
    %p91 = pneg %p85
    %p92 = scmp.eq.s32.totalorder %s8, 1
    %p93 = por %p91, %p92
    %p94 = scmp.ne.s32.totalorder %s86, %s89
    %p95 = scmp.eq.s32.totalorder %s8, 0
    %p96 = por %p94, %p95
    %p97 = scmp.ne.s32.totalorder %s86, %s89
    %p98 = scmp.eq.s32.totalorder %s13, 1
    %p99 = por %p97, %p98
    %p100 = scmp.ne.s32.totalorder %s89, %s90
    %p101 = scmp.eq.s32.totalorder %s13, 0
    %p102 = por %p100, %p101
    %p103 = scmp.ne.s32.totalorder %s89, %s90
    %p104 = scmp.eq.s32.totalorder %s14, 1
    %p105 = por %p103, %p104
    %p107 = scmp.ne.s32.totalorder %s90, %s106
    %p108 = scmp.eq.s32.totalorder %s14, 0
    %p109 = por %p107, %p108
    %p110 = scmp.le.s32.totalorder 1, %s8
    %p111 = scmp.lt.s32.totalorder %s8, 3
    %p112 = pnand %p110, %p111
    %p113 = pneg %p112
    // Predicated region
    $region9: #{tpu_custom_call.1} parent=5 // pred_check
      _
    $region10: #{tpu_custom_call.1} parent=5 // pred_check_branch
      %115 = sbr.rel (%p112) target = $region12
    $region11: #{tpu_custom_call.1} parent=5 // pred_region
      %s116 = ssub.s32 %s8, 1
      // Predicated region
      $region13: #{tpu_custom_call.1} parent=11 // pred_check
        %p117 = pneg %p74
      $region14: #{tpu_custom_call.1} parent=11 // pred_check_branch
        %119 = sbr.rel (%p117) target = $region16
      $region15: #{tpu_custom_call.1} parent=11 // pred_region
        %s120 = smul.u32 22, %s18
        %p121 = scmp.lt.s32.totalorder %s120, 21
        %s122 = scalar_select %p121, %s120, 21
        %s123 = smul.addr %s122, 8
        %s124 = scalar_lea.vmem %s1, %s123
        %s125 = smul.u32 22, %s18
      $region16: #{tpu_custom_call.1} parent=11 // pred_fallthru
        _
    $region12: #{tpu_custom_call.1} parent=5 // pred_fallthru
      _
    %p126 = scmp.lt.s32.totalorder %s8, 2
    // Predicated region
    $region17: #{tpu_custom_call.1} parent=5 // pred_check
      %p127 = pneg %p126
    $region18: #{tpu_custom_call.1} parent=5 // pred_check_branch
      %129 = sbr.rel (%p127) target = $region20
    $region19: #{tpu_custom_call.1} parent=5 // pred_region
      // Predicated region
      $region21: #{tpu_custom_call.1} parent=19 // pred_check
        %p130 = pneg %p42
      $region22: #{tpu_custom_call.1} parent=19 // pred_check_branch
        %132 = sbr.rel (%p130) target = $region24
      $region23: #{tpu_custom_call.1} parent=19 // pred_region
        %s133 = smul.u32 22, %s16
        %p134 = scmp.lt.s32.totalorder %s15, 1
        %s135 = scalar_select %p134, %s15, 1
        %p136 = scmp.lt.s32.totalorder %s133, 21
        %s137 = scalar_select %p136, %s133, 21
        %s138 = smul.addr %s135, 22
        %s139 = sadd.s32 %s137, %s138
        %s140 = smul.addr %s139, 8
        %s141 = scalar_lea.vmem %s0, %s140
        %s142 = smul.u32 22, %s16
      $region24: #{tpu_custom_call.1} parent=19 // pred_fallthru
        _
    $region20: #{tpu_custom_call.1} parent=5 // pred_fallthru
      _
    %p143 = scmp.le.s32.totalorder 1, %s8
    %p144 = scmp.lt.s32.totalorder %s8, 3
    %p145 = pnand %p143, %p144
    %p146 = pneg %p145
    // Predicated region
    $region25: #{tpu_custom_call.1} parent=5 // pred_check
      _
    $region26: #{tpu_custom_call.1} parent=5 // pred_check_branch
      %148 = sbr.rel (%p145) target = $region28
    $region27: #{tpu_custom_call.1} parent=5 // pred_region
      %s149 = ssub.s32 %s8, 1
      %s150 = smul.u32 22, %s18
      %p151 = scmp.lt.s32.totalorder %s17, 1
      %s152 = scalar_select %p151, %s17, 1
      %p153 = scmp.lt.s32.totalorder %s150, 21
      %s154 = scalar_select %p153, %s150, 21
      %s155 = smul.addr %s152, 22
      %s156 = sadd.s32 %s154, %s155
      %s157 = smul.addr %s156, 8
      %s158 = scalar_lea.vmem %s0, %s157
      %p159 = pneg %p48
      %p160 = pneg %p45
      %s161 = smul.u32 22, %s18
      %p162 = scmp.lt.s32.totalorder %s161, 21
      %s163 = scalar_select %p162, %s161, 21
      %s164 = smul.addr %s163, 8
      %s165 = scalar_lea.vmem %s1, %s164
      %p166 = pneg %p74
      %p167 = pneg %p71
      %p168 = pneg %p102
      %p169 = pneg %p99
      %s170 = smul.u32 22, %s18
      %p171 = scmp.lt.s32.totalorder %s17, 1
      %s172 = scalar_select %p171, %s17, 1
      %p173 = scmp.lt.s32.totalorder %s170, 21
      %s174 = scalar_select %p173, %s170, 21
      %s175 = smul.addr %s172, 22
      %s176 = sadd.s32 %s174, %s175
      %s177 = smul.addr %s176, 8
      %s178 = scalar_lea.vmem %s2, %s177
      %s179 = smul.u32 22, %s18
      %p180 = scmp.lt.s32.totalorder %s17, 1
      %s181 = scalar_select %p180, %s17, 1
      %p182 = scmp.lt.s32.totalorder %s179, 21
      %s183 = scalar_select %p182, %s179, 21
      %s184 = smul.addr %s181, 22
      %s185 = sadd.s32 %s183, %s184
      %s186 = smul.addr %s185, 8
      %s187 = scalar_lea.vmem %s0, %s186
      %s188 = smul.u32 22, %s18
      %s189 = smul.u32 22, %s18
      %p190 = scmp.lt.s32.totalorder %s189, 21
      %s191 = scalar_select %p190, %s189, 21
      %s192 = smul.addr %s191, 8
      %s193 = scalar_lea.vmem %s1, %s192
      %s194 = smul.u32 22, %s18
      %s195 = smul.u32 22, %s18
      %p196 = scmp.lt.s32.totalorder %s17, 1
      %s197 = scalar_select %p196, %s17, 1
      %p198 = scmp.lt.s32.totalorder %s195, 21
      %s199 = scalar_select %p198, %s195, 21
      %s200 = smul.addr %s197, 22
      %s201 = sadd.s32 %s199, %s200
      %s202 = smul.addr %s201, 8
      %s203 = scalar_lea.vmem %s2, %s202
      %s204 = smul.u32 22, %s18
      %v205 = vld [vmem:[%s187] sm:$0xff]
      %v206 = vld [vmem:[%s187 + $0x8] sm:$0xff]
      %v207 = vld [vmem:[%s187 + $0x10] sm:$0xff]
      %v208 = vld [vmem:[%s187 + $0x18] sm:$0xff]
      %v209 = vld [vmem:[%s187 + $0x20] sm:$0xff]
      %v210 = vld [vmem:[%s187 + $0x28] sm:$0xff]
      %v211 = vld [vmem:[%s187 + $0x30] sm:$0xff]
      %v212 = vld [vmem:[%s187 + $0x38] sm:$0xff]
      %v213 = vld [vmem:[%s187 + $0x40] sm:$0xff]
      %v214 = vld [vmem:[%s187 + $0x48] sm:$0xff]
      %v215 = vld [vmem:[%s187 + $0x50] sm:$0xff]
      %v216 = vld [vmem:[%s187 + $0x58] sm:$0xff]
      %v217 = vld [vmem:[%s187 + $0x60] sm:$0xff]
      %v218 = vld [vmem:[%s187 + $0x68] sm:$0xff]
      %v219 = vld [vmem:[%s187 + $0x70] sm:$0xff]
      %v220 = vld [vmem:[%s187 + $0x78] sm:$0xff]
      %v221 = vld [vmem:[%s187 + $0x80] sm:$0xff]
      %v222 = vld [vmem:[%s187 + $0x88] sm:$0xff]
      %v223 = vld [vmem:[%s187 + $0x90] sm:$0xff]
      %v224 = vld [vmem:[%s187 + $0x98] sm:$0xff]
      %v225 = vld [vmem:[%s187 + $0xa0] sm:$0xff]
      %v226 = vld [vmem:[%s187 + $0xa8] sm:$0xff]
      %v227 = vld [vmem:[%s193] sm:$0xff]
      %v228 = vld [vmem:[%s193 + $0x8] sm:$0xff]
      %v229 = vld [vmem:[%s193 + $0x10] sm:$0xff]
      %v230 = vld [vmem:[%s193 + $0x18] sm:$0xff]
      %v231 = vld [vmem:[%s193 + $0x20] sm:$0xff]
      %v232 = vld [vmem:[%s193 + $0x28] sm:$0xff]
      %v233 = vld [vmem:[%s193 + $0x30] sm:$0xff]
      %v234 = vld [vmem:[%s193 + $0x38] sm:$0xff]
      %v235 = vld [vmem:[%s193 + $0x40] sm:$0xff]
      %v236 = vld [vmem:[%s193 + $0x48] sm:$0xff]
      %v237 = vld [vmem:[%s193 + $0x50] sm:$0xff]
      %v238 = vld [vmem:[%s193 + $0x58] sm:$0xff]
      %v239 = vld [vmem:[%s193 + $0x60] sm:$0xff]
      %v240 = vld [vmem:[%s193 + $0x68] sm:$0xff]
      %v241 = vld [vmem:[%s193 + $0x70] sm:$0xff]
      %v242 = vld [vmem:[%s193 + $0x78] sm:$0xff]
      %v243 = vld [vmem:[%s193 + $0x80] sm:$0xff]
      %v244 = vld [vmem:[%s193 + $0x88] sm:$0xff]
      %v245 = vld [vmem:[%s193 + $0x90] sm:$0xff]
      %v246 = vld [vmem:[%s193 + $0x98] sm:$0xff]
      %v247 = vld [vmem:[%s193 + $0xa0] sm:$0xff]
      %v248 = vld [vmem:[%s193 + $0xa8] sm:$0xff]
      %v249 = vadd.f32 %v205, %v227
      %v250 = vadd.f32 %v206, %v228
      %v251 = vadd.f32 %v207, %v229
      %v252 = vadd.f32 %v208, %v230
      %v253 = vadd.f32 %v209, %v231
      %v254 = vadd.f32 %v210, %v232
      %v255 = vadd.f32 %v211, %v233
      %v256 = vadd.f32 %v212, %v234
      %v257 = vadd.f32 %v213, %v235
      %v258 = vadd.f32 %v214, %v236
      %v259 = vadd.f32 %v215, %v237
      %v260 = vadd.f32 %v216, %v238
      %v261 = vadd.f32 %v217, %v239
      %v262 = vadd.f32 %v218, %v240
      %v263 = vadd.f32 %v219, %v241
      %v264 = vadd.f32 %v220, %v242
      %v265 = vadd.f32 %v221, %v243
      %v266 = vadd.f32 %v222, %v244
      %v267 = vadd.f32 %v223, %v245
      %v268 = vadd.f32 %v224, %v246
      %v269 = vadd.f32 %v225, %v247
      %v270 = vadd.f32 %v226, %v248
      %vm271 = vcmask 261120
      %272 = vst.msk [vmem:[%s203] sm:$0xff] %vm271, %v249
      %273 = vst.msk [vmem:[%s203 + $0x8] sm:$0xff] %vm271, %v250
      %274 = vst.msk [vmem:[%s203 + $0x10] sm:$0xff] %vm271, %v251
      %275 = vst.msk [vmem:[%s203 + $0x18] sm:$0xff] %vm271, %v252
      %276 = vst.msk [vmem:[%s203 + $0x20] sm:$0xff] %vm271, %v253
      %277 = vst.msk [vmem:[%s203 + $0x28] sm:$0xff] %vm271, %v254
      %278 = vst.msk [vmem:[%s203 + $0x30] sm:$0xff] %vm271, %v255
      %279 = vst.msk [vmem:[%s203 + $0x38] sm:$0xff] %vm271, %v256
      %280 = vst.msk [vmem:[%s203 + $0x40] sm:$0xff] %vm271, %v257
      %281 = vst.msk [vmem:[%s203 + $0x48] sm:$0xff] %vm271, %v258
      %282 = vst.msk [vmem:[%s203 + $0x50] sm:$0xff] %vm271, %v259
      %283 = vst.msk [vmem:[%s203 + $0x58] sm:$0xff] %vm271, %v260
      %284 = vst.msk [vmem:[%s203 + $0x60] sm:$0xff] %vm271, %v261
      %285 = vst.msk [vmem:[%s203 + $0x68] sm:$0xff] %vm271, %v262
      %286 = vst.msk [vmem:[%s203 + $0x70] sm:$0xff] %vm271, %v263
      %287 = vst.msk [vmem:[%s203 + $0x78] sm:$0xff] %vm271, %v264
      %288 = vst.msk [vmem:[%s203 + $0x80] sm:$0xff] %vm271, %v265
      %289 = vst.msk [vmem:[%s203 + $0x88] sm:$0xff] %vm271, %v266
      %290 = vst.msk [vmem:[%s203 + $0x90] sm:$0xff] %vm271, %v267
      %291 = vst.msk [vmem:[%s203 + $0x98] sm:$0xff] %vm271, %v268
      %292 = vst.msk [vmem:[%s203 + $0xa0] sm:$0xff] %vm271, %v269
      %293 = vst.msk [vmem:[%s203 + $0xa8] sm:$0xff] %vm271, %v270
      %s294 = smul.u32 22, %s18
      %p295 = scmp.lt.s32.totalorder %s17, 1
      %s296 = scalar_select %p295, %s17, 1
      %p297 = scmp.lt.s32.totalorder %s294, 21
      %s298 = scalar_select %p297, %s294, 21
      %s299 = smul.addr %s296, 22
      %s300 = sadd.s32 %s298, %s299
      %s301 = smul.addr %s300, 8
      %s302 = scalar_lea.vmem %s2, %s301
      // Predicated region
      $region29: #{tpu_custom_call.1} parent=27 // pred_check
        %p303 = pneg %p99
      $region30: #{tpu_custom_call.1} parent=27 // pred_check_branch
        %305 = sbr.rel (%p303) target = $region32
      $region31: #{tpu_custom_call.1} parent=27 // pred_region
        %s306 = smul.u32 22, %s18
      $region32: #{tpu_custom_call.1} parent=27 // pred_fallthru
        _
    $region28: #{tpu_custom_call.1} parent=5 // pred_fallthru
      _
    %p307 = scmp.le.s32.totalorder 2, %s8
    // Predicated region
    $region33: #{tpu_custom_call.1} parent=5 // pred_check
      %p308 = pneg %p307
    $region34: #{tpu_custom_call.1} parent=5 // pred_check_branch
      %310 = sbr.rel (%p308) target = $region36
    $region35: #{tpu_custom_call.1} parent=5 // pred_region
      %s311 = ssub.s32 %s8, 2
      // Predicated region
      $region37: #{tpu_custom_call.1} parent=35 // pred_check
        %p312 = pneg %p105
      $region38: #{tpu_custom_call.1} parent=35 // pred_check_branch
        %314 = sbr.rel (%p312) target = $region40
      $region39: #{tpu_custom_call.1} parent=35 // pred_region
        %s315 = smul.u32 22, %s20
        %p316 = scmp.lt.s32.totalorder %s19, 1
        %s317 = scalar_select %p316, %s19, 1
        %p318 = scmp.lt.s32.totalorder %s315, 21
        %s319 = scalar_select %p318, %s315, 21
        %s320 = smul.addr %s317, 22
        %s321 = sadd.s32 %s319, %s320
        %s322 = smul.addr %s321, 8
        %s323 = scalar_lea.vmem %s2, %s322
      $region40: #{tpu_custom_call.1} parent=35 // pred_fallthru
        _
    $region36: #{tpu_custom_call.1} parent=5 // pred_fallthru
      _
  $region6: #{tpu_custom_call.1} parent=0 // loop_footer
    %s12 = sadd.s32 1, %s8
  $region7: #{tpu_custom_call.1} parent=0 // loop_footer_branch
    %7 = sbr.rel target = $region3
  $region8: #{tpu_custom_call.1} parent=0 // loop_exit
    _

</llo_original>
